<compile_context>
chip_gen: v7x
topology: tpu7x:2x2x1
jax: 0.10.0
libtpu: 0.0.40
codegen_flags: <defaults>
</compile_context>

<pallas_src>
import functools

import jax
import jax.numpy as jnp
from jax.experimental import pallas as pl
from jax.experimental.pallas import tpu as pltpu

LANE = 128
SUBLANE = 8
MAX_TILE_ROWS = 4096      # 4096 x 128 x 4B = 2 MiB per f32 input block


def _round_up(x, m):
    return -(-x // m) * m


def _num_row_partitions():
    """2 on dual-TensorCore chips (v7x); 1 on single-TC chips (v5e/v6e)."""
    try:
        kind = jax.devices()[0].device_kind.lower()
    except Exception:
        return 1
    return 2 if any(s in kind for s in ("v7", "tpu7", "7x")) else 1


def _focal_bce_kernel(x_ref, t_ref, o_ref, acc_ref, *,
                      logits, binary_targets, n, full_rows, rem_lanes,
                      tile_rows, steps, mask_possible, fuse_epilogue,
                      alpha, gamma):
    p = pl.program_id(0)          # row partition ('parallel', dual-TC on v7x)
    i = pl.program_id(1)          # reduction step ('arbitrary')

    @pl.when(i == 0)
    def _():
        acc_ref[...] = jnp.zeros_like(acc_ref)

    x = x_ref[...].astype(jnp.float32)
    t = t_ref[...].astype(jnp.float32)

    if logits:
        # numerically stable BCE-with-logits: max(x,0) - x*t + log1p(exp(-|x|))
        bce = jnp.maximum(x, 0.0) - x * t + jnp.log1p(jnp.exp(-jnp.abs(x)))
    elif binary_targets:
        # hard {0,1} targets: one EUP transcendental per element
        bce = -jnp.maximum(jnp.log(jnp.where(t > 0.5, x, 1.0 - x)), -100.0)
    else:
        # PyTorch binary_cross_entropy clamps each log term at -100
        log_x = jnp.maximum(jnp.log(x), -100.0)
        log_1mx = jnp.maximum(jnp.log1p(-x), -100.0)
        bce = -(t * log_x + (1.0 - t) * log_1mx)

    def _accum(vals):
        # VPU-only collapse of the block onto the resident (8,128) accumulator.
        acc_ref[...] += vals.reshape(tile_rows // SUBLANE, SUBLANE, LANE).sum(axis=0)

    if not mask_possible:
        _accum(bce)
    else:
        row0 = (p * steps + i) * tile_rows
        needs_mask = row0 + tile_rows > full_rows   # only the tail block(s)

        @pl.when(jnp.logical_not(needs_mask))
        def _():
            _accum(bce)

        @pl.when(needs_mask)
        def _():
            r = jax.lax.broadcasted_iota(jnp.int32, (tile_rows, LANE), 0) + row0
            l = jax.lax.broadcasted_iota(jnp.int32, (tile_rows, LANE), 1)
            valid = (r < full_rows) | ((r == full_rows) & (l < rem_lanes))
            _accum(jnp.where(valid, bce, 0.0))

    @pl.when(i == steps - 1)
    def _():
        total = jnp.sum(acc_ref[...], axis=0, keepdims=True)   # (1, 128)  XLU
        total = jnp.sum(total, axis=1, keepdims=True)           # (1, 1)    XLU
        if fuse_epilogue:
            bce_mean = total / jnp.float32(n)
            pt = jnp.exp(-bce_mean)
            o_ref[0] = (alpha * (1.0 - pt) ** gamma * bce_mean).astype(jnp.float32)
        else:
            o_ref[0] = total


def focal_loss(inputs, targets, alpha=1.0, gamma=2, logits=False, reduce=True,
               binary_targets=False):
    """Pallas implementation of FocalLoss.forward.

    Returns a scalar (the reference module returns the same scalar whether
    `reduce` is True or False, because BCE is already mean-reduced).
    Set binary_targets=True only when targets are known to be {0,1}."""
    del reduce  # see note above
    assert inputs.shape == targets.shape
    n = int(inputs.size)
    assert n > 0

    # sublane packing granularity (8 f32 / 16 bf16 / 32 int8)
    sub = max(SUBLANE,
              32 // max(inputs.dtype.itemsize, 1),
              32 // max(targets.dtype.itemsize, 1))

    rows = -(-n // LANE)
    rows_padded = _round_up(rows, sub)
    padded_n = rows_padded * LANE

    x = inputs.reshape(-1)
    t = targets.reshape(-1)
    if padded_n != n:
        # Small pad (< sub*128 elements) only to legalize the (rows,128)
        # reshape; raggedness itself is handled by the in-kernel tail mask.
        x = jnp.pad(x, (0, padded_n - n))
        t = jnp.pad(t, (0, padded_n - n))
    x2 = x.reshape(rows_padded, LANE)        # dtype preserved (f32 or bf16)
    t2 = t.reshape(rows_padded, LANE)

    tile_rows = min(MAX_TILE_ROWS, rows_padded)
    steps_total = -(-rows_padded // tile_rows)
    num_parts = _num_row_partitions()
    if steps_total < num_parts:
        num_parts = 1
    steps = -(-steps_total // num_parts)

    full_rows = n // LANE                    # fully valid rows
    rem_lanes = n % LANE                     # valid lanes in row `full_rows`
    mask_possible = num_parts * steps * tile_rows > full_rows
    fuse_epilogue = (num_parts == 1)

    kernel = functools.partial(
        _focal_bce_kernel,
        logits=logits, binary_targets=binary_targets, n=n,
        full_rows=full_rows, rem_lanes=rem_lanes,
        tile_rows=tile_rows, steps=steps, mask_possible=mask_possible,
        fuse_epilogue=fuse_epilogue, alpha=alpha, gamma=gamma)

    if num_parts * steps > steps_total:
        # odd steps_total split across 2 partitions: clamp the surplus block
        # onto the last valid block (its contribution is fully masked to 0).
        def in_map(p_, i_):
            return (jnp.minimum(p_ * steps + i_, steps_total - 1), 0)
    else:
        def in_map(p_, i_):
            return (p_ * steps + i_, 0)

    cost = pl.CostEstimate(
        flops=8 * n,
        transcendentals=(1 if (binary_targets and not logits) else 2) * n,
        bytes_accessed=n * (x2.dtype.itemsize + t2.dtype.itemsize)
        + num_parts * 4)

    out = pl.pallas_call(
        kernel,
        out_shape=jax.ShapeDtypeStruct((num_parts, 1, 1), jnp.float32),
        grid_spec=pltpu.PrefetchScalarGridSpec(
            num_scalar_prefetch=0,
            grid=(num_parts, steps),
            in_specs=[
                pl.BlockSpec((tile_rows, LANE), in_map),
                pl.BlockSpec((tile_rows, LANE), in_map),
            ],
            out_specs=pl.BlockSpec((1, 1, 1), lambda p_, i_: (p_, 0, 0)),
            scratch_shapes=[pltpu.VMEM((SUBLANE, LANE), jnp.float32)],
        ),
        compiler_params=pltpu.CompilerParams(
            dimension_semantics=("parallel", "arbitrary"),
            vmem_limit_bytes=32 * 1024 * 1024),
        cost_estimate=cost,
    )(x2, t2)

    if fuse_epilogue:
        return out[0, 0, 0]

    # cross-partition combine + focal epilogue (only when num_parts > 1)
    bce_mean = jnp.sum(out) / jnp.float32(n)
    pt = jnp.exp(-bce_mean)
    return alpha * (1.0 - pt) ** gamma * bce_mean


def focal_loss_ref(inputs, targets, alpha=1.0, gamma=2, logits=False):
    x = inputs.astype(jnp.float32)
    t = targets.astype(jnp.float32)
    if logits:
        bce = jnp.maximum(x, 0.0) - x * t + jnp.log1p(jnp.exp(-jnp.abs(x)))
    else:
        bce = -(t * jnp.maximum(jnp.log(x), -100.0)
                + (1.0 - t) * jnp.maximum(jnp.log1p(-x), -100.0))
    bce_mean = jnp.mean(bce)
    pt = jnp.exp(-bce_mean)
    return alpha * (1.0 - pt) ** gamma * bce_mean


if __name__ == "__main__":
    key = jax.random.PRNGKey(0)
    k1, k2, k3, k4 = jax.random.split(key, 4)

    # FocalLoss defaults: alpha=1, gamma=2, logits=False -> inputs are
    # probabilities in (0, 1); targets are {0, 1} floats.
    shape = (2, 4, 16, 16)
    probs = jax.nn.sigmoid(jax.random.normal(k1, shape, dtype=jnp.float32))
    targets = jax.random.bernoulli(k2, 0.5, shape).astype(jnp.float32)

    out = focal_loss(probs, targets, alpha=1, gamma=2, logits=False, reduce=True)
    out = jax.block_until_ready(out)
    ref = focal_loss_ref(probs, targets, alpha=1, gamma=2, logits=False)
    assert jnp.allclose(out, ref, rtol=2e-5, atol=1e-6), (out, ref)

    # Single-transcendental fast path for hard {0,1} targets.
    out_b = focal_loss(probs, targets, alpha=1, gamma=2, logits=False,
                       binary_targets=True)
    out_b = jax.block_until_ready(out_b)
    assert jnp.allclose(out_b, ref, rtol=2e-5, atol=1e-6), (out_b, ref)

    # Ragged (non 8*128-divisible) size + logits path exercises the tail mask.
    shape2 = (3, 5, 7, 11)
    logit_in = jax.random.normal(k3, shape2, dtype=jnp.float32)
    targets2 = jax.random.bernoulli(k4, 0.5, shape2).astype(jnp.float32)
    out2 = focal_loss(logit_in, targets2, alpha=0.25, gamma=2, logits=True)
    out2 = jax.block_until_ready(out2)
    ref2 = focal_loss_ref(logit_in, targets2, alpha=0.25, gamma=2, logits=True)
    assert jnp.allclose(out2, ref2, rtol=2e-5, atol=1e-6), (out2, ref2)

    print("KERNEL_OK")
</pallas_src>

<mosaic_0001>
module attributes {stable_mosaic.version = 11 : i64} {
  func.func @_focal_bce_kernel(%arg0: i32, %arg1: i32, %arg2: memref<16x128xf32, #tpu.memory_space<vmem>>, %arg3: memref<16x128xf32, #tpu.memory_space<vmem>>, %arg4: memref<1x1x1xf32, #tpu.memory_space<vmem>>, %arg5: memref<8x128xf32, #tpu.memory_space<vmem>>) attributes {dimension_semantics = [#tpu.dimension_semantics<parallel>, #tpu.dimension_semantics<arbitrary>], iteration_bounds = array<i64: 1, 1>, scalar_prefetch = 0 : i64, scratch_operands = 1 : i64, tpu.core_type = #tpu.core_type<tc>, window_params = [{transform_indices = @transform_0, window_bounds = array<i64: 16, 128>}, {transform_indices = @transform_1, window_bounds = array<i64: 16, 128>}, {transform_indices = @transform_2, window_bounds = array<i64: 1, 1, 1>}]} {
    %c0_i32 = arith.constant 0 : i32
    %0 = arith.cmpi eq, %arg1, %c0_i32 : i32
    %1 = arith.extui %0 : i1 to i32
    %c0_i32_0 = arith.constant 0 : i32
    %2 = arith.cmpi ne, %1, %c0_i32_0 : i32
    scf.if %2 {
      %cst_15 = arith.constant 0.000000e+00 : f32
      %28 = vector.broadcast %cst_15 : f32 to vector<8x128xf32>
      %c0_16 = arith.constant 0 : index
      %c0_17 = arith.constant 0 : index
      %29 = vector.load %arg5[%c0_16, %c0_17] : memref<8x128xf32, #tpu.memory_space<vmem>>, vector<8x128xf32>
      tpu.vector_store %arg5[%c0_16, %c0_17], %28 {strides = array<i32>} : memref<8x128xf32, #tpu.memory_space<vmem>>, vector<8x128xf32>,
    } else {
    }
    %c0 = arith.constant 0 : index
    %c0_1 = arith.constant 0 : index
    %3 = vector.load %arg2[%c0, %c0_1] : memref<16x128xf32, #tpu.memory_space<vmem>>, vector<16x128xf32>
    %c0_2 = arith.constant 0 : index
    %c0_3 = arith.constant 0 : index
    %4 = vector.load %arg3[%c0_2, %c0_3] : memref<16x128xf32, #tpu.memory_space<vmem>>, vector<16x128xf32>
    %5 = math.log %3 : vector<16x128xf32>
    %cst = arith.constant -1.000000e+02 : f32
    %6 = vector.broadcast %cst : f32 to vector<16x128xf32>
    %7 = arith.maximumf %5, %6 : vector<16x128xf32>
    %cst_4 = arith.constant 0.000000e+00 : f32
    %8 = vector.broadcast %cst_4 : f32 to vector<16x128xf32>
    %9 = arith.subf %8, %3 : vector<16x128xf32>
    %10 = math.log1p %9 : vector<16x128xf32>
    %cst_5 = arith.constant -1.000000e+02 : f32
    %11 = vector.broadcast %cst_5 : f32 to vector<16x128xf32>
    %12 = arith.maximumf %10, %11 : vector<16x128xf32>
    %13 = arith.mulf %4, %7 : vector<16x128xf32>
    %cst_6 = arith.constant 1.000000e+00 : f32
    %14 = vector.broadcast %cst_6 : f32 to vector<16x128xf32>
    %15 = arith.subf %14, %4 : vector<16x128xf32>
    %16 = arith.mulf %15, %12 : vector<16x128xf32>
    %17 = arith.addf %13, %16 : vector<16x128xf32>
    %cst_7 = arith.constant 0.000000e+00 : f32
    %18 = vector.broadcast %cst_7 : f32 to vector<16x128xf32>
    %19 = arith.subf %18, %17 : vector<16x128xf32>
    %c0_8 = arith.constant 0 : index
    %c0_9 = arith.constant 0 : index
    %20 = vector.load %arg5[%c0_8, %c0_9] : memref<8x128xf32, #tpu.memory_space<vmem>>, vector<8x128xf32>
    %21 = vector.shape_cast %19 : vector<16x128xf32> to vector<2x8x128xf32>
    %cst_10 = arith.constant dense<0.000000e+00> : vector<8x128xf32>
    %22 = vector.multi_reduction <add>, %21, %cst_10 [0] : vector<2x8x128xf32> to vector<8x128xf32>
    %23 = arith.addf %20, %22 : vector<8x128xf32>
    %c0_11 = arith.constant 0 : index
    %c0_12 = arith.constant 0 : index
    %24 = vector.load %arg5[%c0_11, %c0_12] : memref<8x128xf32, #tpu.memory_space<vmem>>, vector<8x128xf32>
    tpu.vector_store %arg5[%c0_11, %c0_12], %23 {strides = array<i32>} : memref<8x128xf32, #tpu.memory_space<vmem>>, vector<8x128xf32>,
    %c0_i32_13 = arith.constant 0 : i32
    %25 = arith.cmpi eq, %arg1, %c0_i32_13 : i32
    %26 = arith.extui %25 : i1 to i32
    %c0_i32_14 = arith.constant 0 : i32
    %27 = arith.cmpi ne, %26, %c0_i32_14 : i32
    scf.if %27 {
      %c0_15 = arith.constant 0 : index
      %c0_16 = arith.constant 0 : index
      %28 = vector.load %arg5[%c0_15, %c0_16] : memref<8x128xf32, #tpu.memory_space<vmem>>, vector<8x128xf32>
      %cst_17 = arith.constant dense<0.000000e+00> : vector<128xf32>
      %29 = vector.multi_reduction <add>, %28, %cst_17 [0] : vector<8x128xf32> to vector<128xf32>
      %30 = vector.shape_cast %29 : vector<128xf32> to vector<1x128xf32>
      %cst_18 = arith.constant dense<0.000000e+00> : vector<1xf32>
      %31 = vector.multi_reduction <add>, %30, %cst_18 [1] : vector<1x128xf32> to vector<1xf32>
      %32 = vector.shape_cast %31 : vector<1xf32> to vector<1x1xf32>
      %cst_19 = arith.constant 2.048000e+03 : f32
      %33 = vector.broadcast %cst_19 : f32 to vector<1x1xf32>
      %34 = arith.divf %32, %33 : vector<1x1xf32>
      %cst_20 = arith.constant 0.000000e+00 : f32
      %35 = vector.broadcast %cst_20 : f32 to vector<1x1xf32>
      %36 = arith.subf %35, %34 : vector<1x1xf32>
      %37 = math.exp %36 : vector<1x1xf32>
      %cst_21 = arith.constant 1.000000e+00 : f32
      %38 = vector.broadcast %cst_21 : f32 to vector<1x1xf32>
      %39 = arith.subf %38, %37 : vector<1x1xf32>
      %40 = arith.mulf %39, %39 : vector<1x1xf32>
      %cst_22 = arith.constant 1.000000e+00 : f32
      %41 = vector.broadcast %cst_22 : f32 to vector<1x1xf32>
      %42 = arith.mulf %41, %40 : vector<1x1xf32>
      %43 = arith.mulf %42, %34 : vector<1x1xf32>
      %c0_23 = arith.constant 0 : index
      %c0_24 = arith.constant 0 : index
      %c0_25 = arith.constant 0 : index
      %44 = vector.load %arg4[%c0_23, %c0_24, %c0_25] : memref<1x1x1xf32, #tpu.memory_space<vmem>>, vector<1x1x1xf32>
      %45 = vector.shape_cast %44 : vector<1x1x1xf32> to vector<1x1xf32>
      %46 = vector.shape_cast %43 : vector<1x1xf32> to vector<1x1x1xf32>
      tpu.vector_store %arg4[%c0_23, %c0_24, %c0_25], %46 {strides = array<i32>} : memref<1x1x1xf32, #tpu.memory_space<vmem>>, vector<1x1x1xf32>,
    } else {
    }
    return
  }
  func.func @transform_0(%arg0: i32, %arg1: i32) -> (i32, i32) {
    %c1_i32 = arith.constant 1 : i32
    %0 = arith.muli %arg0, %c1_i32 : i32
    %1 = arith.addi %0, %arg1 : i32
    %c0_i32 = arith.constant 0 : i32
    %c0_i32_0 = arith.constant 0 : i32
    return %1, %c0_i32 : i32, i32
  }
  func.func @transform_1(%arg0: i32, %arg1: i32) -> (i32, i32) {
    %c1_i32 = arith.constant 1 : i32
    %0 = arith.muli %arg0, %c1_i32 : i32
    %1 = arith.addi %0, %arg1 : i32
    %c0_i32 = arith.constant 0 : i32
    %c0_i32_0 = arith.constant 0 : i32
    return %1, %c0_i32 : i32, i32
  }
  func.func @transform_2(%arg0: i32, %arg1: i32) -> (i32, i32, i32) {
    %c0_i32 = arith.constant 0 : i32
    %c0_i32_0 = arith.constant 0 : i32
    %c0_i32_1 = arith.constant 0 : i32
    return %arg0, %c0_i32, %c0_i32_0 : i32, i32, i32
  }
}

</mosaic_0001>

<llo_original>
// kernel: tpu_custom_call.1
$region0: #{tpu_custom_call.1}
  #allocation0 [shape = 'u32[]', space=smem, size = 0x4, offset = 0x4, fixed_abs, tag = 'smem constant byte address 0x4 - core index']
  #allocation1 [shape = 'u32[144,128]{1,0:T(1,128)}', space=vmem, size = 0x12000, scoped, tag = 'internal scratch']
  #allocation2 [shape = 'f32[8,128]{1,0:T(8,128)}', space=vmem, size = 0x1000, scoped, tag = 'scratch operand']
  %s0 = inlined_call_operand.hbm [shape: f32[16,128], index: 0, kind: input, shape index: {}]
  %s1 = inlined_call_operand.hbm [shape: f32[16,128], index: 1, kind: input, shape index: {}]
  %s2 = inlined_call_operand.hbm [shape: f32[1,1,1], index: 2, kind: output, shape index: {}]
  %s3 = sld [smem:[#allocation0]]
  $region34: #{tpu_custom_call.1} parent=0
    _
  %s5 = ssub.s32 1, %s3
  %s6 = scalar_select 0, %s5, %s3
  $region1: #{tpu_custom_call.1} parent=0
    #allocation3 [shape = 'u8[8192]{0}', space=vmem, size = 0x2000, scoped, tag = 'input window, operand 0, single buffered']
    #allocation4 [shape = 's32[1]{0}', space=sflag, size = 0x4, scoped, tag = 'scoped memory for tpu_custom_call.1']
    #allocation5 [shape = 's32[1]{0}', space=sflag, size = 0x4, scoped, tag = 'scoped memory for tpu_custom_call.1']
    #allocation6 [shape = 'u8[8192]{0}', space=vmem, size = 0x2000, scoped, tag = 'input window, operand 1, single buffered']
    #allocation7 [shape = 's32[1]{0}', space=sflag, size = 0x4, scoped, tag = 'scoped memory for tpu_custom_call.1']
    #allocation8 [shape = 'u8[512]{0}', space=vmem, size = 0x400, scoped, tag = 'output window, operand 0, single buffered']
    %7 = vsyncpa [#allocation4], 0
    %8 = vsyncpa [#allocation7], 0
    %9 = vsyncpa [#allocation5], 0
    // Predicated region
    $region2: #{tpu_custom_call.1} parent=1 // pred_check
      _
    $region3: #{tpu_custom_call.1} parent=1 // pred_check_branch
      %11 = sbr.rel (0) target = $region5
    $region4: #{tpu_custom_call.1} parent=1 // pred_region
      %s12 = sadd.s32 0, 0
      %s13 = smul.u32 2, %s12
      %s15 = ssub.s32 256, 256
      %16 = vsyncadd [#allocation4], %s15
      %s17 = smul.addr %s13, 128
      %s18 = scalar_lea.hbm %s0, %s17
      %s19 = sshll.u32 [#allocation3], 4
      %s20 = int_to_ptr.vmem [resolvable:$true] %s19
      %25 = dma.hbm_to_vmem [thread:$0]  %s18, 256, %s20, [#allocation4], 128, 128, 8
    $region5: #{tpu_custom_call.1} parent=1 // pred_fallthru
      _
    // Predicated region
    $region6: #{tpu_custom_call.1} parent=1 // pred_check
      _
    $region7: #{tpu_custom_call.1} parent=1 // pred_check_branch
      %27 = sbr.rel (0) target = $region9
    $region8: #{tpu_custom_call.1} parent=1 // pred_region
      %s28 = sadd.s32 0, 0
      %s29 = smul.u32 2, %s28
      %s31 = ssub.s32 256, 256
      %32 = vsyncadd [#allocation7], %s31
      %s33 = smul.addr %s29, 128
      %s34 = scalar_lea.hbm %s1, %s33
      %s35 = sshll.u32 [#allocation6], 4
      %s36 = int_to_ptr.vmem [resolvable:$true] %s35
      %41 = dma.hbm_to_vmem [thread:$0]  %s34, 256, %s36, [#allocation7], 128, 128, 8
    $region9: #{tpu_custom_call.1} parent=1 // pred_fallthru
      _
    // Predicated region
    $region10: #{tpu_custom_call.1} parent=1 // pred_check
      _
    $region11: #{tpu_custom_call.1} parent=1 // pred_check_branch
      %43 = sbr.rel (0) target = $region13
    $region12: #{tpu_custom_call.1} parent=1 // pred_region
      %44 = dma.done [#allocation4], 256
    $region13: #{tpu_custom_call.1} parent=1 // pred_fallthru
      _
    // Predicated region
    $region14: #{tpu_custom_call.1} parent=1 // pred_check
      _
    $region15: #{tpu_custom_call.1} parent=1 // pred_check_branch
      %46 = sbr.rel (0) target = $region17
    $region16: #{tpu_custom_call.1} parent=1 // pred_region
      %47 = dma.done [#allocation7], 256
    $region17: #{tpu_custom_call.1} parent=1 // pred_fallthru
      _
    %s48 = sadd.s32 0, 0
    %s49 = smul.u32 2, %s48
    %s50 = sadd.s32 0, 0
    %s51 = smul.u32 2, %s50
    %p52 = scmp.eq.s32.totalorder 0, 0
    // Predicated region
    $region18: #{tpu_custom_call.1} parent=1 // pred_check
      %p53 = pneg %p52
    $region19: #{tpu_custom_call.1} parent=1 // pred_check_branch
      %55 = sbr.rel (%p53) target = $region21
    $region20: #{tpu_custom_call.1} parent=1 // pred_region
      %56 = vst [vmem:[#allocation2] sm:$0xff] 0.0
    $region21: #{tpu_custom_call.1} parent=1 // pred_fallthru
      _
    %v57 = vld [vmem:[#allocation3] sm:$0xff]
    %v58 = vld [vmem:[#allocation3 + $0x8] sm:$0xff]
    %v59 = vld [vmem:[#allocation6] sm:$0xff]
    %v60 = vld [vmem:[#allocation6 + $0x8] sm:$0xff]
    %v61 = vlog2.pop %v57
    %v62 = vmul.f32 %v61, 0.6931472
    %v63 = vlog2.pop %v58
    %v64 = vmul.f32 %v63, 0.6931472
    %v65 = vmax.f32 %v62, -100.0
    %v66 = vmax.f32 %v64, -100.0
    %v67 = vsub.f32 0.0, %v57
    %v68 = vsub.f32 0.0, %v58
    %v69 = vadd.f32 %v67, 1.0
    %v70 = vlog2.pop %v69
    %v71 = vmul.f32 %v70, 0.6931472
    %v72 = vmul.f32 -0.5, %v67
    %v73 = vadd.f32 %v72, 1.0
    %v74 = vmul.f32 %v73, %v67
    %v75 = vand.u32 2147483647, %v67
    %vm76 = vcmp.lt.f32.partialorder %v75, 0.0004427343
    %v77 = vsel %vm76, %v74, %v71
    %v78 = vadd.f32 %v68, 1.0
    %v79 = vlog2.pop %v78
    %v80 = vmul.f32 %v79, 0.6931472
    %v81 = vmul.f32 -0.5, %v68
    %v82 = vadd.f32 %v81, 1.0
    %v83 = vmul.f32 %v82, %v68
    %v84 = vand.u32 2147483647, %v68
    %vm85 = vcmp.lt.f32.partialorder %v84, 0.0004427343
    %v86 = vsel %vm85, %v83, %v80
    %v87 = vmax.f32 %v77, -100.0
    %v88 = vmax.f32 %v86, -100.0
    %v89 = vmul.f32 %v59, %v65
    %v90 = vmul.f32 %v60, %v66
    %v91 = vsub.f32 1.0, %v59
    %v92 = vsub.f32 1.0, %v60
    %v93 = vmul.f32 %v91, %v87
    %v94 = vmul.f32 %v92, %v88
    %v95 = vadd.f32 %v89, %v93
    %v96 = vadd.f32 %v90, %v94
    %v97 = vsub.f32 0.0, %v95
    %v98 = vsub.f32 0.0, %v96
    %v99 = vld [vmem:[#allocation2] sm:$0xff]
    %v100 = vadd.f32 %v97, %v98
    %v101 = vadd.f32 %v99, %v100
    %102 = vst [vmem:[#allocation2] sm:$0xff] %v101
    // Predicated region
    $region22: #{tpu_custom_call.1} parent=1 // pred_check
      %p103 = pneg %p52
    $region23: #{tpu_custom_call.1} parent=1 // pred_check_branch
      %105 = sbr.rel (%p103) target = $region25
    $region24: #{tpu_custom_call.1} parent=1 // pred_region
      %v106 = vld [vmem:[#allocation2] sm:$0xff]
      %v107 = vrot.slane %v106, 4
      %v108 = vadd.f32 %v106, %v107
      %v109 = vrot.slane %v108, 2
      %v110 = vadd.f32 %v108, %v109
      %v111 = vrot.slane %v110, 1
      %v112 = vadd.f32 %v110, %v111
      %113 = vadd.xlane.f32.xlu0 %v112
      %v114 = vpop.xlane.xlu0 %113
      %v115 = vrcp.pop 2048.0
      %v116 = vmul.f32 %v114, %v115
      %v117 = vsub.f32 0.0, %v116
      %v118 = vmul.f32 %v117, 1.442695
      %v119 = vpow.pop %v118
      %v120 = vsub.f32 1.0, %v119
      %v121 = vmul.f32 %v120, %v120
      %v122 = vmul.f32 %v121, %v116
      %vm123 = vcmask 0
      %124 = vst.msk [vmem:[#allocation8] sm:$0x1] %vm123, %v122
    $region25: #{tpu_custom_call.1} parent=1 // pred_fallthru
      _
    // Predicated region
    $region26: #{tpu_custom_call.1} parent=1 // pred_check
      _
    $region27: #{tpu_custom_call.1} parent=1 // pred_check_branch
      %126 = sbr.rel (0) target = $region29
    $region28: #{tpu_custom_call.1} parent=1 // pred_region
      %s128 = ssub.s32 16, 16
      %129 = vsyncadd [#allocation5], %s128
      %s131 = sshll.u32 [#allocation8], 4
      %s132 = int_to_ptr.vmem [resolvable:$true] %s131
      %134 = dma.vmem_to_hbm [thread:$0]  %s132, 16, %s2, [#allocation5]
    $region29: #{tpu_custom_call.1} parent=1 // pred_fallthru
      _
    // Predicated region
    $region30: #{tpu_custom_call.1} parent=1 // pred_check
      _
    $region31: #{tpu_custom_call.1} parent=1 // pred_check_branch
      %136 = sbr.rel (0) target = $region33
    $region32: #{tpu_custom_call.1} parent=1 // pred_region
      %137 = dma.done [#allocation5], 16
    $region33: #{tpu_custom_call.1} parent=1 // pred_fallthru
      _
    %138 = vsyncpa [#allocation4], 1
    %139 = vsyncpa [#allocation7], 1
    %140 = vsyncpa [#allocation5], 1

</llo_original>
